<compile_context>
chip_gen: v5e
topology: v5e:2x2
jax: 0.10.0
libtpu: 0.0.40
codegen_flags: <defaults>
</compile_context>

<pallas_src>
import functools
import math

import jax
import jax.numpy as jnp
from jax import lax
from jax.experimental import pallas as pl
from jax.experimental.pallas import tpu as pltpu


LANES = 128
MAX_ROW_TILE = 4096       # rows per grid block (2 MiB f32 per input block)
SUB_ROWS = 512            # rows per in-kernel accumulation sub-step
INV_LN10 = 1.0 / math.log(10.0)


def _round_up(x, m):
    return ((x + m - 1) // m) * m


def _sublane_multiple(dtype):
    """Minimum legal second-minor tile for a dtype (8 f32, 16 bf16, 32 int8)."""
    itemsize = jnp.dtype(dtype).itemsize
    return max(8, 8 * (4 // max(1, itemsize)))


def _device_chunks():
    """Return (num_chunks, use_core_parallel) for the local TPU generation."""
    try:
        kind = jax.devices()[0].device_kind.lower()
    except Exception:
        kind = ""
    if "v7" in kind or "7x" in kind:
        return 2, True            # 2 TensorCores per chip on v7x
    return 1, False               # single TensorCore: no point splitting


def _soft_ce_kernel(pred_ref, tgt_ref, out_ref, *,
                    rows, row_tile, sub_rows, tiles_per_chunk, total_tiles,
                    last_tile_ragged, has_overhang):
    c = pl.program_id(0)          # chunk axis (core-parallel on v7x)
    i = pl.program_id(1)          # tile within chunk (reduction axis)
    tile_idx = c * tiles_per_chunk + i
    n_sub = row_tile // sub_rows

    # Zero this chunk's resident output block on its first reduction step.
    @pl.when(i == 0)
    def _():
        out_ref[...] = jnp.zeros_like(out_ref)

    def sub_step(r0, masked):
        # Cast in-kernel: HBM traffic stays at the input's native width.
        p = pred_ref[pl.ds(r0, sub_rows), :].astype(jnp.float32)
        t = tgt_ref[pl.ds(r0, sub_rows), :].astype(jnp.float32)
        # Natural log; the 1/ln(10) and negation are folded in once at the end.
        prod = jnp.log(p) * t
        if masked:
            # Ragged last tile only.  Select (not multiply) so garbage rows
            # (possibly NaN/Inf after log) cannot leak into the sum.
            row_ids = (tile_idx * row_tile + r0
                       + lax.broadcasted_iota(jnp.int32, (sub_rows, LANES), 0))
            prod = jnp.where(row_ids < rows, prod, 0.0)
        # vreg-shaped accumulation: plain VPU adds into the (1, 8, 128) output
        # block; no per-step cross-lane (XLU) reduction.
        out_ref[...] += (prod.reshape(sub_rows // 8, 8, LANES)
                             .sum(axis=0).reshape(1, 8, LANES))

    def accumulate(masked):
        if n_sub == 1:
            sub_step(0, masked)
        else:
            def body(s, carry):
                sub_step(pl.multiple_of(s * sub_rows, sub_rows), masked)
                return carry
            lax.fori_loop(0, n_sub, body, 0, unroll=True)

    if last_tile_ragged:
        @pl.when(tile_idx < total_tiles - 1)
        def _():
            accumulate(masked=False)

        @pl.when(tile_idx == total_tiles - 1)
        def _():
            accumulate(masked=True)
    elif has_overhang:
        @pl.when(tile_idx < total_tiles)
        def _():
            accumulate(masked=False)
    else:
        accumulate(masked=False)


def soft_cross_entropy_loss(pred, target):
    """Pallas implementation of -sum(log10(pred) * target). Returns f32 scalar."""
    assert pred.shape == target.shape
    pred_flat = pred.reshape(-1)
    tgt_flat = target.reshape(-1)
    n = pred_flat.shape[0]

    rows = n // LANES
    main_n = rows * LANES
    tail = n - main_n

    # Sub-128-element tail (if any): tiny pure-JAX term instead of a full
    # jnp.pad read+write pass over both arrays.
    if tail:
        p_tail = lax.dynamic_slice(pred_flat, (main_n,), (tail,)).astype(jnp.float32)
        t_tail = lax.dynamic_slice(tgt_flat, (main_n,), (tail,)).astype(jnp.float32)
        tail_sum = jnp.sum(jnp.log(p_tail) * t_tail)
    else:
        tail_sum = jnp.float32(0.0)

    if rows == 0:
        return (-tail_sum * jnp.float32(INV_LN10)).astype(jnp.float32)

    pred_2d = (pred_flat[:main_n] if tail else pred_flat).reshape(rows, LANES)
    tgt_2d = (tgt_flat[:main_n] if tail else tgt_flat).reshape(rows, LANES)

    # Biggest sublane-legal row tile; keep it an exact multiple of SUB_ROWS
    # whenever it exceeds one sub-step so the inner loop has no remainder.
    sub_mult = max(_sublane_multiple(pred.dtype), _sublane_multiple(target.dtype))
    row_tile = min(MAX_ROW_TILE, _round_up(rows, sub_mult))
    if row_tile > SUB_ROWS:
        row_tile = _round_up(row_tile, SUB_ROWS)
    sub_rows = min(SUB_ROWS, row_tile)

    total_tiles = pl.cdiv(rows, row_tile)
    last_tile_ragged = (rows % row_tile) != 0

    num_chunks, core_parallel = _device_chunks()
    num_chunks = min(num_chunks, total_tiles)
    tiles_per_chunk = pl.cdiv(total_tiles, num_chunks)
    has_overhang = num_chunks * tiles_per_chunk > total_tiles

    if has_overhang:
        def in_map(c, i):
            # Clamp so the overhang tile of the second chunk stays in bounds;
            # its body is skipped entirely in-kernel.
            return (jnp.minimum(c * tiles_per_chunk + i, total_tiles - 1), 0)
    else:
        def in_map(c, i):
            return (c * tiles_per_chunk + i, 0)

    kernel = functools.partial(
        _soft_ce_kernel,
        rows=rows, row_tile=row_tile, sub_rows=sub_rows,
        tiles_per_chunk=tiles_per_chunk, total_tiles=total_tiles,
        last_tile_ragged=last_tile_ragged, has_overhang=has_overhang)

    def run(dim_semantics):
        return pl.pallas_call(
            kernel,
            out_shape=jax.ShapeDtypeStruct((num_chunks, 8, LANES), jnp.float32),
            grid_spec=pltpu.PrefetchScalarGridSpec(
                num_scalar_prefetch=0,
                grid=(num_chunks, tiles_per_chunk),
                in_specs=[
                    pl.BlockSpec((row_tile, LANES), in_map),
                    pl.BlockSpec((row_tile, LANES), in_map),
                ],
                out_specs=pl.BlockSpec((1, 8, LANES), lambda c, i: (c, 0, 0)),
            ),
            compiler_params=pltpu.CompilerParams(
                dimension_semantics=dim_semantics),
        )(pred_2d, tgt_2d)

    if num_chunks > 1 and core_parallel:
        # v7x: shard the 2 chunks across the 2 TensorCores for the full
        # chip HBM bandwidth; fall back if CORE_PARALLEL fails to lower.
        try:
            out = run((pltpu.CORE_PARALLEL, pltpu.ARBITRARY))
        except Exception:
            out = run(("parallel", "arbitrary"))
    elif num_chunks > 1:
        out = run(("parallel", "arbitrary"))
    else:
        out = run(("arbitrary", "arbitrary"))

    # -sum(log10(p) * t) = -(1/ln 10) * sum(ln(p) * t)
    return -(jnp.sum(out) + tail_sum) * jnp.float32(INV_LN10)


if __name__ == "__main__":
    key = jax.random.PRNGKey(0)
    k1, k2, k3, k4, k5, k6 = jax.random.split(key, 6)

    # Shapes consistent with a classes=5 soft-CE use case: NCHW probabilities.
    N, C, H, W = 2, 5, 16, 16
    pred = jax.nn.softmax(jax.random.normal(k1, (N, C, H, W), jnp.float32), axis=1)
    target = jax.nn.softmax(jax.random.normal(k2, (N, C, H, W), jnp.float32), axis=1)
    result = jax.block_until_ready(soft_cross_entropy_loss(pred, target))
    ref = -jnp.sum(jnp.log10(pred) * target)
    assert jnp.allclose(result, ref, rtol=1e-5, atol=1e-5), (result, ref)

    # Non-lane-multiple element count -> exercises the pure-JAX tail path.
    pred2 = jax.nn.softmax(jax.random.normal(k3, (3, 5, 7, 9), jnp.float32), axis=1)
    target2 = jax.nn.softmax(jax.random.normal(k4, (3, 5, 7, 9), jnp.float32), axis=1)
    result2 = jax.block_until_ready(soft_cross_entropy_loss(pred2, target2))
    ref2 = -jnp.sum(jnp.log10(pred2) * target2)
    assert jnp.allclose(result2, ref2, rtol=1e-5, atol=1e-5), (result2, ref2)

    # Larger input -> exercises multi-tile accumulation, the unrolled 512-row
    # inner loop, and the ragged-last-tile masked path.
    pred3 = jax.nn.softmax(jax.random.normal(k5, (8, 5, 128, 128), jnp.float32), axis=1)
    target3 = jax.nn.softmax(jax.random.normal(k6, (8, 5, 128, 128), jnp.float32), axis=1)
    result3 = jax.block_until_ready(soft_cross_entropy_loss(pred3, target3))
    ref3 = -jnp.sum(jnp.log10(pred3) * target3)
    assert jnp.allclose(result3, ref3, rtol=1e-4, atol=1e-2), (result3, ref3)

    print("KERNEL_OK")
</pallas_src>

<mosaic_0001>
module attributes {stable_mosaic.version = 11 : i64} {
  func.func @_soft_ce_kernel(%arg0: i32, %arg1: i32, %arg2: memref<24x128xf32, #tpu.memory_space<vmem>>, %arg3: memref<24x128xf32, #tpu.memory_space<vmem>>, %arg4: memref<1x8x128xf32, #tpu.memory_space<vmem>>) attributes {dimension_semantics = [#tpu.dimension_semantics<arbitrary>, #tpu.dimension_semantics<arbitrary>], iteration_bounds = array<i64: 1, 1>, scalar_prefetch = 0 : i64, scratch_operands = 0 : i64, tpu.core_type = #tpu.core_type<tc>, window_params = [{transform_indices = @transform_0, window_bounds = array<i64: 24, 128>}, {transform_indices = @transform_1, window_bounds = array<i64: 24, 128>}, {transform_indices = @transform_2, window_bounds = array<i64: 1, 8, 128>}]} {
    %c1_i32 = arith.constant 1 : i32
    %0 = arith.muli %arg0, %c1_i32 : i32
    %1 = arith.addi %0, %arg1 : i32
    %c0_i32 = arith.constant 0 : i32
    %2 = arith.cmpi eq, %arg1, %c0_i32 : i32
    %3 = arith.extui %2 : i1 to i32
    %c0_i32_0 = arith.constant 0 : i32
    %4 = arith.cmpi ne, %3, %c0_i32_0 : i32
    scf.if %4 {
      %cst = arith.constant 0.000000e+00 : f32
      %11 = vector.broadcast %cst : f32 to vector<1x8x128xf32>
      %c0 = arith.constant 0 : index
      %c0_5 = arith.constant 0 : index
      %c0_6 = arith.constant 0 : index
      %12 = vector.load %arg4[%c0, %c0_5, %c0_6] : memref<1x8x128xf32, #tpu.memory_space<vmem>>, vector<1x8x128xf32>
      tpu.vector_store %arg4[%c0, %c0_5, %c0_6], %11 {strides = array<i32>} : memref<1x8x128xf32, #tpu.memory_space<vmem>>, vector<1x8x128xf32>,
    } else {
    }
    %c0_i32_1 = arith.constant 0 : i32
    %5 = arith.cmpi slt, %1, %c0_i32_1 : i32
    %6 = arith.extui %5 : i1 to i32
    %c0_i32_2 = arith.constant 0 : i32
    %7 = arith.cmpi ne, %6, %c0_i32_2 : i32
    scf.if %7 {
      %c0 = arith.constant 0 : index
      %c0_5 = arith.constant 0 : index
      %11 = vector.load %arg2[%c0, %c0_5] : memref<24x128xf32, #tpu.memory_space<vmem>>, vector<24x128xf32>
      %c0_6 = arith.constant 0 : index
      %c0_7 = arith.constant 0 : index
      %12 = vector.load %arg3[%c0_6, %c0_7] : memref<24x128xf32, #tpu.memory_space<vmem>>, vector<24x128xf32>
      %13 = math.log %11 : vector<24x128xf32>
      %14 = arith.mulf %13, %12 : vector<24x128xf32>
      %c0_8 = arith.constant 0 : index
      %c0_9 = arith.constant 0 : index
      %c0_10 = arith.constant 0 : index
      %15 = vector.load %arg4[%c0_8, %c0_9, %c0_10] : memref<1x8x128xf32, #tpu.memory_space<vmem>>, vector<1x8x128xf32>
      %16 = vector.shape_cast %14 : vector<24x128xf32> to vector<3x8x128xf32>
      %cst = arith.constant dense<0.000000e+00> : vector<8x128xf32>
      %17 = vector.multi_reduction <add>, %16, %cst [0] : vector<3x8x128xf32> to vector<8x128xf32>
      %18 = vector.shape_cast %17 : vector<8x128xf32> to vector<1x8x128xf32>
      %19 = arith.addf %15, %18 : vector<1x8x128xf32>
      %c0_11 = arith.constant 0 : index
      %c0_12 = arith.constant 0 : index
      %c0_13 = arith.constant 0 : index
      %20 = vector.load %arg4[%c0_11, %c0_12, %c0_13] : memref<1x8x128xf32, #tpu.memory_space<vmem>>, vector<1x8x128xf32>
      tpu.vector_store %arg4[%c0_11, %c0_12, %c0_13], %19 {strides = array<i32>} : memref<1x8x128xf32, #tpu.memory_space<vmem>>, vector<1x8x128xf32>,
    } else {
    }
    %c0_i32_3 = arith.constant 0 : i32
    %8 = arith.cmpi eq, %1, %c0_i32_3 : i32
    %9 = arith.extui %8 : i1 to i32
    %c0_i32_4 = arith.constant 0 : i32
    %10 = arith.cmpi ne, %9, %c0_i32_4 : i32
    scf.if %10 {
      %c0 = arith.constant 0 : index
      %c0_5 = arith.constant 0 : index
      %11 = vector.load %arg2[%c0, %c0_5] : memref<24x128xf32, #tpu.memory_space<vmem>>, vector<24x128xf32>
      %c0_6 = arith.constant 0 : index
      %c0_7 = arith.constant 0 : index
      %12 = vector.load %arg3[%c0_6, %c0_7] : memref<24x128xf32, #tpu.memory_space<vmem>>, vector<24x128xf32>
      %13 = math.log %11 : vector<24x128xf32>
      %14 = arith.mulf %13, %12 : vector<24x128xf32>
      %c24_i32 = arith.constant 24 : i32
      %15 = arith.muli %1, %c24_i32 : i32
      %c0_i32_8 = arith.constant 0 : i32
      %16 = arith.addi %15, %c0_i32_8 : i32
      %17 = tpu.iota {dimensions = array<i32: 0>} : vector<24x128xi32>
      %18 = vector.broadcast %16 : i32 to vector<24x128xi32>
      %19 = arith.addi %18, %17 : vector<24x128xi32>
      %c20_i32 = arith.constant 20 : i32
      %20 = vector.broadcast %c20_i32 : i32 to vector<24x128xi32>
      %21 = arith.cmpi slt, %19, %20 : vector<24x128xi32>
      %cst = arith.constant 0.000000e+00 : f32
      %22 = vector.broadcast %cst : f32 to vector<24x128xf32>
      %23 = arith.select %21, %14, %22 : vector<24x128xi1>, vector<24x128xf32>
      %c0_9 = arith.constant 0 : index
      %c0_10 = arith.constant 0 : index
      %c0_11 = arith.constant 0 : index
      %24 = vector.load %arg4[%c0_9, %c0_10, %c0_11] : memref<1x8x128xf32, #tpu.memory_space<vmem>>, vector<1x8x128xf32>
      %25 = vector.shape_cast %23 : vector<24x128xf32> to vector<3x8x128xf32>
      %cst_12 = arith.constant dense<0.000000e+00> : vector<8x128xf32>
      %26 = vector.multi_reduction <add>, %25, %cst_12 [0] : vector<3x8x128xf32> to vector<8x128xf32>
      %27 = vector.shape_cast %26 : vector<8x128xf32> to vector<1x8x128xf32>
      %28 = arith.addf %24, %27 : vector<1x8x128xf32>
      %c0_13 = arith.constant 0 : index
      %c0_14 = arith.constant 0 : index
      %c0_15 = arith.constant 0 : index
      %29 = vector.load %arg4[%c0_13, %c0_14, %c0_15] : memref<1x8x128xf32, #tpu.memory_space<vmem>>, vector<1x8x128xf32>
      tpu.vector_store %arg4[%c0_13, %c0_14, %c0_15], %28 {strides = array<i32>} : memref<1x8x128xf32, #tpu.memory_space<vmem>>, vector<1x8x128xf32>,
    } else {
    }
    return
  }
  func.func @transform_0(%arg0: i32, %arg1: i32) -> (i32, i32) {
    %c1_i32 = arith.constant 1 : i32
    %0 = arith.muli %arg0, %c1_i32 : i32
    %1 = arith.addi %0, %arg1 : i32
    %c0_i32 = arith.constant 0 : i32
    %c0_i32_0 = arith.constant 0 : i32
    return %1, %c0_i32 : i32, i32
  }
  func.func @transform_1(%arg0: i32, %arg1: i32) -> (i32, i32) {
    %c1_i32 = arith.constant 1 : i32
    %0 = arith.muli %arg0, %c1_i32 : i32
    %1 = arith.addi %0, %arg1 : i32
    %c0_i32 = arith.constant 0 : i32
    %c0_i32_0 = arith.constant 0 : i32
    return %1, %c0_i32 : i32, i32
  }
  func.func @transform_2(%arg0: i32, %arg1: i32) -> (i32, i32, i32) {
    %c0_i32 = arith.constant 0 : i32
    %c0_i32_0 = arith.constant 0 : i32
    %c0_i32_1 = arith.constant 0 : i32
    return %arg0, %c0_i32, %c0_i32_0 : i32, i32, i32
  }
}

</mosaic_0001>

<llo_original>
// kernel: tpu_custom_call.1
$region0: #{tpu_custom_call.1}
  #allocation0 [shape = 'u32[]', space=smem, size = 0x4, offset = 0x4, fixed_abs, tag = 'smem constant byte address 0x4 - core index']
  #allocation1 [shape = 'u32[72,128]{1,0:T(1,128)}', space=vmem, size = 0x9000, scoped, tag = 'internal scratch']
  %s0 = inlined_call_operand.hbm [shape: f32[20,128], index: 0, kind: input, shape index: {}]
  %s1 = inlined_call_operand.hbm [shape: f32[20,128], index: 1, kind: input, shape index: {}]
  %s2 = inlined_call_operand.hbm [shape: f32[1,8,128], index: 2, kind: output, shape index: {}]
  %s3 = sld [smem:[#allocation0]]
  $region38: #{tpu_custom_call.1} parent=0
    _
  %s5 = ssub.s32 1, %s3
  %s6 = scalar_select 0, %s5, %s3
  $region1: #{tpu_custom_call.1} parent=0
    #allocation2 [shape = 'u8[12288]{0}', space=vmem, size = 0x3000, scoped, tag = 'input window, operand 0, single buffered']
    #allocation3 [shape = 's32[1]{0}', space=sflag, size = 0x4, scoped, tag = 'scoped memory for tpu_custom_call.1']
    #allocation4 [shape = 's32[1]{0}', space=sflag, size = 0x4, scoped, tag = 'scoped memory for tpu_custom_call.1']
    #allocation5 [shape = 'u8[12288]{0}', space=vmem, size = 0x3000, scoped, tag = 'input window, operand 1, single buffered']
    #allocation6 [shape = 's32[1]{0}', space=sflag, size = 0x4, scoped, tag = 'scoped memory for tpu_custom_call.1']
    #allocation7 [shape = 'u8[4096]{0}', space=vmem, size = 0x1000, scoped, tag = 'output window, operand 0, single buffered']
    %7 = vsyncpa [#allocation3], 0
    %8 = vsyncpa [#allocation6], 0
    %9 = vsyncpa [#allocation4], 0
    // Predicated region
    $region2: #{tpu_custom_call.1} parent=1 // pred_check
      _
    $region3: #{tpu_custom_call.1} parent=1 // pred_check_branch
      %11 = sbr.rel (0) target = $region5
    $region4: #{tpu_custom_call.1} parent=1 // pred_region
      %s12 = sadd.s32 0, 0
      %s13 = smul.u32 3, %s12
      %15 = vsyncadd [#allocation3], 0
      %s16 = smul.addr %s13, 8
      %s17 = scalar_lea.hbm %s0, %s16
      %s18 = sshll.u32 %s17, 4
      %s19 = int_to_ptr.hbm [resolvable:$true] %s18
      %s20 = sshll.u32 [#allocation2], 4
      %s21 = int_to_ptr.vmem [resolvable:$true] %s20
      %26 = dma.hbm_to_vmem [thread:$0]  %s19, 384, %s21, [#allocation3], 128, 128, 8
    $region5: #{tpu_custom_call.1} parent=1 // pred_fallthru
      _
    // Predicated region
    $region6: #{tpu_custom_call.1} parent=1 // pred_check
      _
    $region7: #{tpu_custom_call.1} parent=1 // pred_check_branch
      %28 = sbr.rel (0) target = $region9
    $region8: #{tpu_custom_call.1} parent=1 // pred_region
      %s29 = sadd.s32 0, 0
      %s30 = smul.u32 3, %s29
      %32 = vsyncadd [#allocation6], 0
      %s33 = smul.addr %s30, 8
      %s34 = scalar_lea.hbm %s1, %s33
      %s35 = sshll.u32 %s34, 4
      %s36 = int_to_ptr.hbm [resolvable:$true] %s35
      %s37 = sshll.u32 [#allocation5], 4
      %s38 = int_to_ptr.vmem [resolvable:$true] %s37
      %43 = dma.hbm_to_vmem [thread:$0]  %s36, 384, %s38, [#allocation6], 128, 128, 8
    $region9: #{tpu_custom_call.1} parent=1 // pred_fallthru
      _
    // Predicated region
    $region10: #{tpu_custom_call.1} parent=1 // pred_check
      _
    $region11: #{tpu_custom_call.1} parent=1 // pred_check_branch
      %45 = sbr.rel (0) target = $region13
    $region12: #{tpu_custom_call.1} parent=1 // pred_region
      %47 = dma.done [#allocation3], 384
    $region13: #{tpu_custom_call.1} parent=1 // pred_fallthru
      _
    // Predicated region
    $region14: #{tpu_custom_call.1} parent=1 // pred_check
      _
    $region15: #{tpu_custom_call.1} parent=1 // pred_check_branch
      %49 = sbr.rel (0) target = $region17
    $region16: #{tpu_custom_call.1} parent=1 // pred_region
      %51 = dma.done [#allocation6], 384
    $region17: #{tpu_custom_call.1} parent=1 // pred_fallthru
      _
    %s52 = sadd.s32 0, 0
    %s53 = smul.u32 3, %s52
    %s54 = sadd.s32 0, 0
    %s55 = smul.u32 3, %s54
    %s56 = sadd.s32 0, 0
    %p57 = scmp.eq.s32.totalorder 0, 0
    // Predicated region
    $region18: #{tpu_custom_call.1} parent=1 // pred_check
      %p58 = pneg %p57
    $region19: #{tpu_custom_call.1} parent=1 // pred_check_branch
      %60 = sbr.rel (%p58) target = $region21
    $region20: #{tpu_custom_call.1} parent=1 // pred_region
      %61 = vst [vmem:[#allocation7] sm:$0xff] 0.0
    $region21: #{tpu_custom_call.1} parent=1 // pred_fallthru
      _
    %p62 = scmp.lt.s32.totalorder %s56, 0
    // Predicated region
    $region22: #{tpu_custom_call.1} parent=1 // pred_check
      %p63 = pneg %p62
    $region23: #{tpu_custom_call.1} parent=1 // pred_check_branch
      %65 = sbr.rel (%p63) target = $region25
    $region24: #{tpu_custom_call.1} parent=1 // pred_region
      %v66 = vld [vmem:[#allocation2] sm:$0xff]
      %v67 = vld [vmem:[#allocation2 + $0x8] sm:$0xff]
      %v68 = vld [vmem:[#allocation2 + $0x10] sm:$0xff]
      %v69 = vld [vmem:[#allocation5] sm:$0xff]
      %v70 = vld [vmem:[#allocation5 + $0x8] sm:$0xff]
      %v71 = vld [vmem:[#allocation5 + $0x10] sm:$0xff]
      %v72 = vlog2.pop %v66
      %v73 = vmul.f32 %v72, 0.6931472
      %v74 = vlog2.pop %v67
      %v75 = vmul.f32 %v74, 0.6931472
      %v76 = vlog2.pop %v68
      %v77 = vmul.f32 %v76, 0.6931472
      %v78 = vmul.f32 %v73, %v69
      %v79 = vmul.f32 %v75, %v70
      %v80 = vmul.f32 %v77, %v71
      %v81 = vld [vmem:[#allocation7] sm:$0xff]
      %v82 = vadd.f32 %v78, %v79
      %v83 = vadd.f32 %v82, %v80
      %v84 = vadd.f32 %v81, %v83
      %85 = vst [vmem:[#allocation7] sm:$0xff] %v84
    $region25: #{tpu_custom_call.1} parent=1 // pred_fallthru
      _
    %p86 = scmp.eq.s32.totalorder %s56, 0
    // Predicated region
    $region26: #{tpu_custom_call.1} parent=1 // pred_check
      %p87 = pneg %p86
    $region27: #{tpu_custom_call.1} parent=1 // pred_check_branch
      %89 = sbr.rel (%p87) target = $region29
    $region28: #{tpu_custom_call.1} parent=1 // pred_region
      %v90 = vld [vmem:[#allocation2] sm:$0xff]
      %v91 = vld [vmem:[#allocation2 + $0x8] sm:$0xff]
      %v92 = vld [vmem:[#allocation2 + $0x10] sm:$0xff]
      %v93 = vld [vmem:[#allocation5] sm:$0xff]
      %v94 = vld [vmem:[#allocation5 + $0x8] sm:$0xff]
      %v95 = vld [vmem:[#allocation5 + $0x10] sm:$0xff]
      %v96 = vlog2.pop %v90
      %v97 = vmul.f32 %v96, 0.6931472
      %v98 = vlog2.pop %v91
      %v99 = vmul.f32 %v98, 0.6931472
      %v100 = vlog2.pop %v92
      %v101 = vmul.f32 %v100, 0.6931472
      %v102 = vmul.f32 %v97, %v93
      %v103 = vmul.f32 %v99, %v94
      %v104 = vmul.f32 %v101, %v95
      %s105 = smul.u32 %s56, 24
      %v106 = vlaneseq
      %v107 = vshrl.u32 %v106, 7
      %v108 = vadd.s32 %v107, 8
      %v109 = vadd.s32 %v107, 16
      %v110 = vstv %s105
      %v111 = vadd.s32 %v110, %v107
      %v112 = vadd.s32 %v110, %v108
      %v113 = vadd.s32 %v110, %v109
      %vm114 = vcmp.lt.s32.totalorder %v111, 20
      %vm115 = vcmp.lt.s32.totalorder %v112, 20
      %vm116 = vcmp.lt.s32.totalorder %v113, 20
      %v117 = vsel %vm114, %v102, 0.0
      %v118 = vsel %vm115, %v103, 0.0
      %v119 = vsel %vm116, %v104, 0.0
      %v120 = vld [vmem:[#allocation7] sm:$0xff]
      %v121 = vadd.f32 %v117, %v118
      %v122 = vadd.f32 %v121, %v119
      %v123 = vadd.f32 %v120, %v122
      %124 = vst [vmem:[#allocation7] sm:$0xff] %v123
    $region29: #{tpu_custom_call.1} parent=1 // pred_fallthru
      _
    // Predicated region
    $region30: #{tpu_custom_call.1} parent=1 // pred_check
      _
    $region31: #{tpu_custom_call.1} parent=1 // pred_check_branch
      %126 = sbr.rel (0) target = $region33
    $region32: #{tpu_custom_call.1} parent=1 // pred_region
      %128 = vsyncadd [#allocation4], 0
      %s130 = sshll.u32 [#allocation7], 4
      %s131 = int_to_ptr.vmem [resolvable:$true] %s130
      %s132 = sshll.u32 %s2, 4
      %s133 = int_to_ptr.hbm [resolvable:$true] %s132
      %135 = dma.vmem_to_hbm [thread:$0]  %s131, 128, %s133, [#allocation4]
    $region33: #{tpu_custom_call.1} parent=1 // pred_fallthru
      _
    // Predicated region
    $region34: #{tpu_custom_call.1} parent=1 // pred_check
      _
    $region35: #{tpu_custom_call.1} parent=1 // pred_check_branch
      %137 = sbr.rel (0) target = $region37
    $region36: #{tpu_custom_call.1} parent=1 // pred_region
      %139 = dma.done [#allocation4], 128
    $region37: #{tpu_custom_call.1} parent=1 // pred_fallthru
      _
    %140 = vsyncpa [#allocation3], 1
    %141 = vsyncpa [#allocation6], 1
    %142 = vsyncpa [#allocation4], 1

</llo_original>
